<compile_context>
chip_gen: v5e
topology: v5e:2x2
jax: 0.10.0
libtpu: 0.0.40
codegen_flags: <defaults>
</compile_context>

<pallas_src>
import math

import jax
import jax.numpy as jnp
from jax import lax
from jax.experimental import pallas as pl
from jax.experimental.pallas import tpu as pltpu

_INV_SQRT2 = 0.7071067811865476   # hoisted 1/sqrt(2)
_TILE_B_MAX = 2048                # per-step footprint at 2048 rows is ~4 MB -> fits everywhere
_SUBLANE = 8


def _cdiv(a, b):
    return (a + b - 1) // b


def _round_up(x, m):
    return ((x + m - 1) // m) * m


def _gelu_exact(x):
    # nn.GELU() default = exact erf-based GELU.
    return 0.5 * x * (1.0 + lax.erf(x * _INV_SQRT2))


def mlp_kernel(x_ref, w1_ref, b1_ref, w2_ref, b2_ref, w3_ref, b3_ref,
               w4_ref, b4_ref, o_ref):
    x = x_ref[...]  # fp32 already

    h = jnp.dot(x, w1_ref[...], preferred_element_type=jnp.float32) + b1_ref[...]
    h = _gelu_exact(h)

    h = jnp.dot(h, w2_ref[...], preferred_element_type=jnp.float32) + b2_ref[...]
    h = _gelu_exact(h)

    h = jnp.dot(h, w3_ref[...], preferred_element_type=jnp.float32) + b3_ref[...]
    h = _gelu_exact(h)

    y = jnp.dot(h, w4_ref[...], preferred_element_type=jnp.float32) + b4_ref[...]
    o_ref[...] = y.astype(o_ref.dtype)


def _batch_tiling(B):
    """Balanced batch split: minimal padding, even grid for v7x's 2 TensorCores."""
    n_tiles = max(1, _cdiv(B, _TILE_B_MAX))
    if B >= 2 * _SUBLANE:
        # At least 2 (and an even number of) grid steps so both v7x cores get work.
        n_tiles = _round_up(max(n_tiles, 2), 2)
    tile_b = _round_up(_cdiv(B, n_tiles), _SUBLANE)
    b_pad = n_tiles * tile_b
    return tile_b, b_pad, n_tiles


def mlp_forward(x, params):
    """Fused 4-layer MLP; balanced batch-tiled grid, weights resident, unpadded output."""
    w1, b1, w2, b2, w3, b3, w4, b4 = params
    B, in_dim = x.shape
    hid = w1.shape[1]
    out_dim = w4.shape[1]

    tile_b, b_pad, n_tiles = _batch_tiling(B)
    xp = jnp.pad(x, ((0, b_pad - B), (0, 0))) if b_pad != B else x

    # Advisory cost estimate for XLA's scheduler (real, unpadded output width).
    flops = 2 * b_pad * (in_dim * hid + 2 * hid * hid + hid * out_dim)
    transcendentals = 3 * b_pad * hid
    bytes_accessed = 4 * (
        b_pad * in_dim + b_pad * out_dim
        + in_dim * hid + 2 * hid * hid + hid * out_dim
        + 3 * hid + out_dim
    )

    def const_spec(shape):
        # Constant block index -> array stays VMEM-resident across all grid steps.
        return pl.BlockSpec(shape, lambda i: (0, 0))

    out_padded = pl.pallas_call(
        mlp_kernel,
        out_shape=jax.ShapeDtypeStruct((b_pad, out_dim), jnp.float32),
        grid_spec=pltpu.PrefetchScalarGridSpec(
            num_scalar_prefetch=0,
            grid=(n_tiles,),
            in_specs=[
                pl.BlockSpec((tile_b, in_dim), lambda i: (i, 0)),    # x tile
                const_spec((in_dim, hid)),   const_spec((1, hid)),   # w1, b1
                const_spec((hid, hid)),      const_spec((1, hid)),   # w2, b2
                const_spec((hid, hid)),      const_spec((1, hid)),   # w3, b3
                const_spec((hid, out_dim)),  const_spec((1, out_dim)),  # w4, b4
            ],
            out_specs=pl.BlockSpec((tile_b, out_dim), lambda i: (i, 0)),
        ),
        compiler_params=pltpu.CompilerParams(
            dimension_semantics=("parallel",),
            vmem_limit_bytes=32 * 1024 * 1024,
        ),
        cost_estimate=pl.CostEstimate(
            flops=flops,
            transcendentals=transcendentals,
            bytes_accessed=bytes_accessed,
        ),
    )(xp, w1, b1, w2, b2, w3, b3, w4, b4)

    return out_padded[:B, :]


def init_linear_params(key, in_features, out_features):
    """Deterministic init mimicking PyTorch nn.Linear (Kaiming-uniform W, uniform b)."""
    kw, kb = jax.random.split(key)
    bound = 1.0 / math.sqrt(in_features)
    # Stored as (in, out) so the kernel computes x @ W directly.
    w = jax.random.uniform(kw, (in_features, out_features), jnp.float32, -bound, bound)
    b = jax.random.uniform(kb, (1, out_features), jnp.float32, -bound, bound)
    return w, b


def make_model_params(key, input_dim, output_dim, hidden_dim=128):
    keys = jax.random.split(key, 4)
    w1, b1 = init_linear_params(keys[0], input_dim, hidden_dim)
    w2, b2 = init_linear_params(keys[1], hidden_dim, hidden_dim)
    w3, b3 = init_linear_params(keys[2], hidden_dim, hidden_dim)
    w4, b4 = init_linear_params(keys[3], hidden_dim, output_dim)
    return (w1, b1, w2, b2, w3, b3, w4, b4)


def reference_forward(x, params):
    w1, b1, w2, b2, w3, b3, w4, b4 = params
    h = _gelu_exact(x @ w1 + b1)
    h = _gelu_exact(h @ w2 + b2)
    h = _gelu_exact(h @ w3 + b3)
    return h @ w4 + b4


# TODO(synk): Model.get_input_gradient (per-output-column input Jacobian via autograd) is a
# training-time utility, not part of the forward pass; use jax.jacrev on mlp_forward if needed.

if __name__ == "__main__":
    key = jax.random.PRNGKey(0)
    k_x, k_p = jax.random.split(key)

    batch, input_dim, hidden_dim, output_dim = 8, 32, 128, 16
    x = jax.random.normal(k_x, (batch, input_dim), jnp.float32)
    params = make_model_params(k_p, input_dim, output_dim, hidden_dim)

    out = mlp_forward(x, params)
    out = jax.block_until_ready(out)

    ref = reference_forward(x, params)
    assert out.shape == (batch, output_dim)
    assert jnp.allclose(out, ref, atol=1e-5, rtol=1e-5), "mismatch vs reference"

    # Exercise the balanced multi-tile path (B=600 -> 2 tiles of 304 rows, 8 pad rows).
    x_big = jax.random.normal(k_x, (600, input_dim), jnp.float32)
    out_big = jax.block_until_ready(mlp_forward(x_big, params))
    ref_big = reference_forward(x_big, params)
    assert out_big.shape == (600, output_dim)
    assert jnp.allclose(out_big, ref_big, atol=1e-5, rtol=1e-5), "mismatch (big batch)"

    print("KERNEL_OK")
</pallas_src>

<mosaic_0001>
module attributes {stable_mosaic.version = 11 : i64} {
  func.func @mlp_kernel(%arg0: i32, %arg1: memref<8x32xf32, #tpu.memory_space<vmem>>, %arg2: memref<32x128xf32, #tpu.memory_space<vmem>>, %arg3: memref<1x128xf32, #tpu.memory_space<vmem>>, %arg4: memref<128x128xf32, #tpu.memory_space<vmem>>, %arg5: memref<1x128xf32, #tpu.memory_space<vmem>>, %arg6: memref<128x128xf32, #tpu.memory_space<vmem>>, %arg7: memref<1x128xf32, #tpu.memory_space<vmem>>, %arg8: memref<128x16xf32, #tpu.memory_space<vmem>>, %arg9: memref<1x16xf32, #tpu.memory_space<vmem>>, %arg10: memref<8x16xf32, #tpu.memory_space<vmem>>) attributes {dimension_semantics = [#tpu.dimension_semantics<parallel>], iteration_bounds = array<i64: 1>, scalar_prefetch = 0 : i64, scratch_operands = 0 : i64, tpu.core_type = #tpu.core_type<tc>, window_params = [{transform_indices = @transform_0, window_bounds = array<i64: 8, 32>}, {pipeline_mode = #tpu.pipeline_mode<synchronous>, transform_indices = @transform_1, window_bounds = array<i64: 32, 128>}, {pipeline_mode = #tpu.pipeline_mode<synchronous>, transform_indices = @transform_2, window_bounds = array<i64: 1, 128>}, {pipeline_mode = #tpu.pipeline_mode<synchronous>, transform_indices = @transform_3, window_bounds = array<i64: 128, 128>}, {pipeline_mode = #tpu.pipeline_mode<synchronous>, transform_indices = @transform_4, window_bounds = array<i64: 1, 128>}, {pipeline_mode = #tpu.pipeline_mode<synchronous>, transform_indices = @transform_5, window_bounds = array<i64: 128, 128>}, {pipeline_mode = #tpu.pipeline_mode<synchronous>, transform_indices = @transform_6, window_bounds = array<i64: 1, 128>}, {pipeline_mode = #tpu.pipeline_mode<synchronous>, transform_indices = @transform_7, window_bounds = array<i64: 128, 16>}, {pipeline_mode = #tpu.pipeline_mode<synchronous>, transform_indices = @transform_8, window_bounds = array<i64: 1, 16>}, {transform_indices = @transform_9, window_bounds = array<i64: 8, 16>}]} {
    %c0 = arith.constant 0 : index
    %c0_0 = arith.constant 0 : index
    %0 = vector.load %arg1[%c0, %c0_0] : memref<8x32xf32, #tpu.memory_space<vmem>>, vector<8x32xf32>
    %c0_1 = arith.constant 0 : index
    %c0_2 = arith.constant 0 : index
    %1 = vector.load %arg2[%c0_1, %c0_2] : memref<32x128xf32, #tpu.memory_space<vmem>>, vector<32x128xf32>
    %cst = arith.constant dense<0.000000e+00> : vector<8x128xf32>
    %2 = tpu.matmul %0, %1, %cst {dimension_numbers = #tpu.dot_dimension_numbers<[1], [0], [0], [1], [0, 0, 1, 1], [], []>} : vector<8x32xf32>, vector<32x128xf32>, vector<8x128xf32> -> vector<8x128xf32>
    %c0_3 = arith.constant 0 : index
    %c0_4 = arith.constant 0 : index
    %3 = vector.load %arg3[%c0_3, %c0_4] : memref<1x128xf32, #tpu.memory_space<vmem>>, vector<1x128xf32>
    %4 = vector.broadcast %3 : vector<1x128xf32> to vector<8x128xf32>
    %5 = arith.addf %2, %4 : vector<8x128xf32>
    %cst_5 = arith.constant 5.000000e-01 : f32
    %6 = vector.broadcast %cst_5 : f32 to vector<8x128xf32>
    %7 = arith.mulf %6, %5 : vector<8x128xf32>
    %cst_6 = arith.constant 0.707106769 : f32
    %8 = vector.broadcast %cst_6 : f32 to vector<8x128xf32>
    %9 = arith.mulf %5, %8 : vector<8x128xf32>
    %10 = math.erf %9 : vector<8x128xf32>
    %cst_7 = arith.constant 1.000000e+00 : f32
    %11 = vector.broadcast %cst_7 : f32 to vector<8x128xf32>
    %12 = arith.addf %11, %10 : vector<8x128xf32>
    %13 = arith.mulf %7, %12 : vector<8x128xf32>
    %c0_8 = arith.constant 0 : index
    %c0_9 = arith.constant 0 : index
    %14 = vector.load %arg4[%c0_8, %c0_9] : memref<128x128xf32, #tpu.memory_space<vmem>>, vector<128x128xf32>
    %cst_10 = arith.constant dense<0.000000e+00> : vector<8x128xf32>
    %15 = tpu.matmul %13, %14, %cst_10 {dimension_numbers = #tpu.dot_dimension_numbers<[1], [0], [0], [1], [0, 0, 1, 1], [], []>} : vector<8x128xf32>, vector<128x128xf32>, vector<8x128xf32> -> vector<8x128xf32>
    %c0_11 = arith.constant 0 : index
    %c0_12 = arith.constant 0 : index
    %16 = vector.load %arg5[%c0_11, %c0_12] : memref<1x128xf32, #tpu.memory_space<vmem>>, vector<1x128xf32>
    %17 = vector.broadcast %16 : vector<1x128xf32> to vector<8x128xf32>
    %18 = arith.addf %15, %17 : vector<8x128xf32>
    %cst_13 = arith.constant 5.000000e-01 : f32
    %19 = vector.broadcast %cst_13 : f32 to vector<8x128xf32>
    %20 = arith.mulf %19, %18 : vector<8x128xf32>
    %cst_14 = arith.constant 0.707106769 : f32
    %21 = vector.broadcast %cst_14 : f32 to vector<8x128xf32>
    %22 = arith.mulf %18, %21 : vector<8x128xf32>
    %23 = math.erf %22 : vector<8x128xf32>
    %cst_15 = arith.constant 1.000000e+00 : f32
    %24 = vector.broadcast %cst_15 : f32 to vector<8x128xf32>
    %25 = arith.addf %24, %23 : vector<8x128xf32>
    %26 = arith.mulf %20, %25 : vector<8x128xf32>
    %c0_16 = arith.constant 0 : index
    %c0_17 = arith.constant 0 : index
    %27 = vector.load %arg6[%c0_16, %c0_17] : memref<128x128xf32, #tpu.memory_space<vmem>>, vector<128x128xf32>
    %cst_18 = arith.constant dense<0.000000e+00> : vector<8x128xf32>
    %28 = tpu.matmul %26, %27, %cst_18 {dimension_numbers = #tpu.dot_dimension_numbers<[1], [0], [0], [1], [0, 0, 1, 1], [], []>} : vector<8x128xf32>, vector<128x128xf32>, vector<8x128xf32> -> vector<8x128xf32>
    %c0_19 = arith.constant 0 : index
    %c0_20 = arith.constant 0 : index
    %29 = vector.load %arg7[%c0_19, %c0_20] : memref<1x128xf32, #tpu.memory_space<vmem>>, vector<1x128xf32>
    %30 = vector.broadcast %29 : vector<1x128xf32> to vector<8x128xf32>
    %31 = arith.addf %28, %30 : vector<8x128xf32>
    %cst_21 = arith.constant 5.000000e-01 : f32
    %32 = vector.broadcast %cst_21 : f32 to vector<8x128xf32>
    %33 = arith.mulf %32, %31 : vector<8x128xf32>
    %cst_22 = arith.constant 0.707106769 : f32
    %34 = vector.broadcast %cst_22 : f32 to vector<8x128xf32>
    %35 = arith.mulf %31, %34 : vector<8x128xf32>
    %36 = math.erf %35 : vector<8x128xf32>
    %cst_23 = arith.constant 1.000000e+00 : f32
    %37 = vector.broadcast %cst_23 : f32 to vector<8x128xf32>
    %38 = arith.addf %37, %36 : vector<8x128xf32>
    %39 = arith.mulf %33, %38 : vector<8x128xf32>
    %c0_24 = arith.constant 0 : index
    %c0_25 = arith.constant 0 : index
    %40 = vector.load %arg8[%c0_24, %c0_25] : memref<128x16xf32, #tpu.memory_space<vmem>>, vector<128x16xf32>
    %cst_26 = arith.constant dense<0.000000e+00> : vector<8x16xf32>
    %41 = tpu.matmul %39, %40, %cst_26 {dimension_numbers = #tpu.dot_dimension_numbers<[1], [0], [0], [1], [0, 0, 1, 1], [], []>} : vector<8x128xf32>, vector<128x16xf32>, vector<8x16xf32> -> vector<8x16xf32>
    %c0_27 = arith.constant 0 : index
    %c0_28 = arith.constant 0 : index
    %42 = vector.load %arg9[%c0_27, %c0_28] : memref<1x16xf32, #tpu.memory_space<vmem>>, vector<1x16xf32>
    %43 = vector.broadcast %42 : vector<1x16xf32> to vector<8x16xf32>
    %44 = arith.addf %41, %43 : vector<8x16xf32>
    %c0_29 = arith.constant 0 : index
    %c0_30 = arith.constant 0 : index
    %45 = vector.load %arg10[%c0_29, %c0_30] : memref<8x16xf32, #tpu.memory_space<vmem>>, vector<8x16xf32>
    tpu.vector_store %arg10[%c0_29, %c0_30], %44 {strides = array<i32>} : memref<8x16xf32, #tpu.memory_space<vmem>>, vector<8x16xf32>,
    return
  }
  func.func @transform_0(%arg0: i32) -> (i32, i32) {
    %c0_i32 = arith.constant 0 : i32
    %c0_i32_0 = arith.constant 0 : i32
    return %arg0, %c0_i32 : i32, i32
  }
  func.func @transform_1(%arg0: i32) -> (i32, i32) {
    %c0_i32 = arith.constant 0 : i32
    %c0_i32_0 = arith.constant 0 : i32
    %c0_i32_1 = arith.constant 0 : i32
    return %c0_i32, %c0_i32_0 : i32, i32
  }
  func.func @transform_2(%arg0: i32) -> (i32, i32) {
    %c0_i32 = arith.constant 0 : i32
    %c0_i32_0 = arith.constant 0 : i32
    %c0_i32_1 = arith.constant 0 : i32
    return %c0_i32, %c0_i32_0 : i32, i32
  }
  func.func @transform_3(%arg0: i32) -> (i32, i32) {
    %c0_i32 = arith.constant 0 : i32
    %c0_i32_0 = arith.constant 0 : i32
    %c0_i32_1 = arith.constant 0 : i32
    return %c0_i32, %c0_i32_0 : i32, i32
  }
  func.func @transform_4(%arg0: i32) -> (i32, i32) {
    %c0_i32 = arith.constant 0 : i32
    %c0_i32_0 = arith.constant 0 : i32
    %c0_i32_1 = arith.constant 0 : i32
    return %c0_i32, %c0_i32_0 : i32, i32
  }
  func.func @transform_5(%arg0: i32) -> (i32, i32) {
    %c0_i32 = arith.constant 0 : i32
    %c0_i32_0 = arith.constant 0 : i32
    %c0_i32_1 = arith.constant 0 : i32
    return %c0_i32, %c0_i32_0 : i32, i32
  }
  func.func @transform_6(%arg0: i32) -> (i32, i32) {
    %c0_i32 = arith.constant 0 : i32
    %c0_i32_0 = arith.constant 0 : i32
    %c0_i32_1 = arith.constant 0 : i32
    return %c0_i32, %c0_i32_0 : i32, i32
  }
  func.func @transform_7(%arg0: i32) -> (i32, i32) {
    %c0_i32 = arith.constant 0 : i32
    %c0_i32_0 = arith.constant 0 : i32
    %c0_i32_1 = arith.constant 0 : i32
    return %c0_i32, %c0_i32_0 : i32, i32
  }
  func.func @transform_8(%arg0: i32) -> (i32, i32) {
    %c0_i32 = arith.constant 0 : i32
    %c0_i32_0 = arith.constant 0 : i32
    %c0_i32_1 = arith.constant 0 : i32
    return %c0_i32, %c0_i32_0 : i32, i32
  }
  func.func @transform_9(%arg0: i32) -> (i32, i32) {
    %c0_i32 = arith.constant 0 : i32
    %c0_i32_0 = arith.constant 0 : i32
    return %arg0, %c0_i32 : i32, i32
  }
}

</mosaic_0001>

<llo_original>
// kernel: tpu_custom_call.1
$region0: #{tpu_custom_call.1}
  #allocation0 [shape = 'u32[]', space=smem, size = 0x4, offset = 0x4, fixed_abs, tag = 'smem constant byte address 0x4 - core index']
  #allocation1 [shape = 'u32[72,128]{1,0:T(1,128)}', space=vmem, size = 0x9000, scoped, tag = 'internal scratch']
  %s0 = inlined_call_operand.vmem [shape: f32[8,32], index: 0, kind: input, shape index: {}]
  %s1 = inlined_call_operand.hbm [shape: f32[32,128], index: 1, kind: input, shape index: {}]
  %s2 = inlined_call_operand.vmem [shape: f32[1,128], index: 2, kind: input, shape index: {}]
  %s3 = inlined_call_operand.vmem [shape: f32[128,128], index: 3, kind: input, shape index: {}]
  %s4 = inlined_call_operand.vmem [shape: f32[1,128], index: 4, kind: input, shape index: {}]
  %s5 = inlined_call_operand.hbm [shape: f32[128,128], index: 5, kind: input, shape index: {}]
  %s6 = inlined_call_operand.vmem [shape: f32[1,128], index: 6, kind: input, shape index: {}]
  %s7 = inlined_call_operand.vmem [shape: f32[128,16], index: 7, kind: input, shape index: {}]
  %s8 = inlined_call_operand.vmem [shape: f32[1,16], index: 8, kind: input, shape index: {}]
  %s9 = inlined_call_operand.hbm [shape: f32[8,16], index: 9, kind: output, shape index: {}]
  %s10 = sld [smem:[#allocation0]]
  $region54: #{tpu_custom_call.1} parent=0
    _
  %s12 = ssub.s32 1, %s10
  %s13 = scalar_select 0, %s12, %s10
  $region1: #{tpu_custom_call.1} parent=0
    #allocation2 [shape = 'u8[16384]{0}', space=vmem, size = 0x4000, scoped, tag = 'input window, operand 1, single buffered']
    #allocation3 [shape = 's32[1]{0}', space=sflag, size = 0x4, scoped, tag = 'scoped memory for tpu_custom_call.1']
    #allocation4 [shape = 's32[1]{0}', space=sflag, size = 0x4, scoped, tag = 'scoped memory for tpu_custom_call.1']
    #allocation5 [shape = 'u8[65536]{0}', space=vmem, size = 0x10000, scoped, tag = 'input window, operand 5, single buffered']
    #allocation6 [shape = 's32[1]{0}', space=sflag, size = 0x4, scoped, tag = 'scoped memory for tpu_custom_call.1']
    #allocation7 [shape = 'u8[4096]{0}', space=vmem, size = 0x1000, scoped, tag = 'output window, operand 0, single buffered']
    %14 = vsyncpa [#allocation3], 0
    %15 = vsyncpa [#allocation6], 0
    %16 = vsyncpa [#allocation4], 0
    // Predicated region
    $region2: #{tpu_custom_call.1} parent=1 // pred_check
      _
    $region3: #{tpu_custom_call.1} parent=1 // pred_check_branch
      %18 = sbr.rel (0) target = $region5
    $region4: #{tpu_custom_call.1} parent=1 // pred_region
      _
    $region5: #{tpu_custom_call.1} parent=1 // pred_fallthru
      _
    // Predicated region
    $region6: #{tpu_custom_call.1} parent=1 // pred_check
      _
    $region7: #{tpu_custom_call.1} parent=1 // pred_check_branch
      %20 = sbr.rel (0) target = $region9
    $region8: #{tpu_custom_call.1} parent=1 // pred_region
      %22 = vsyncadd [#allocation3], 0
      %s23 = sshll.u32 %s1, 4
      %s24 = int_to_ptr.hbm [resolvable:$true] %s23
      %s25 = sshll.u32 [#allocation2], 4
      %s26 = int_to_ptr.vmem [resolvable:$true] %s25
      %31 = dma.hbm_to_vmem [thread:$0]  %s24, 512, %s26, [#allocation3], 128, 128, 8
    $region9: #{tpu_custom_call.1} parent=1 // pred_fallthru
      _
    // Predicated region
    $region10: #{tpu_custom_call.1} parent=1 // pred_check
      _
    $region11: #{tpu_custom_call.1} parent=1 // pred_check_branch
      %33 = sbr.rel (0) target = $region13
    $region12: #{tpu_custom_call.1} parent=1 // pred_region
      _
    $region13: #{tpu_custom_call.1} parent=1 // pred_fallthru
      _
    // Predicated region
    $region14: #{tpu_custom_call.1} parent=1 // pred_check
      _
    $region15: #{tpu_custom_call.1} parent=1 // pred_check_branch
      %35 = sbr.rel (0) target = $region17
    $region16: #{tpu_custom_call.1} parent=1 // pred_region
      _
    $region17: #{tpu_custom_call.1} parent=1 // pred_fallthru
      _
    // Predicated region
    $region18: #{tpu_custom_call.1} parent=1 // pred_check
      _
    $region19: #{tpu_custom_call.1} parent=1 // pred_check_branch
      %37 = sbr.rel (0) target = $region21
    $region20: #{tpu_custom_call.1} parent=1 // pred_region
      _
    $region21: #{tpu_custom_call.1} parent=1 // pred_fallthru
      _
    // Predicated region
    $region22: #{tpu_custom_call.1} parent=1 // pred_check
      _
    $region23: #{tpu_custom_call.1} parent=1 // pred_check_branch
      %39 = sbr.rel (0) target = $region25
    $region24: #{tpu_custom_call.1} parent=1 // pred_region
      %41 = vsyncadd [#allocation6], 0
      %s42 = sshll.u32 %s5, 4
      %s43 = int_to_ptr.hbm [resolvable:$true] %s42
      %s44 = sshll.u32 [#allocation5], 4
      %s45 = int_to_ptr.vmem [resolvable:$true] %s44
      %50 = dma.hbm_to_vmem [thread:$0]  %s43, 2048, %s45, [#allocation6], 128, 128, 8
    $region25: #{tpu_custom_call.1} parent=1 // pred_fallthru
      _
    // Predicated region
    $region26: #{tpu_custom_call.1} parent=1 // pred_check
      _
    $region27: #{tpu_custom_call.1} parent=1 // pred_check_branch
      %52 = sbr.rel (0) target = $region29
    $region28: #{tpu_custom_call.1} parent=1 // pred_region
      _
    $region29: #{tpu_custom_call.1} parent=1 // pred_fallthru
      _
    // Predicated region
    $region30: #{tpu_custom_call.1} parent=1 // pred_check
      _
    $region31: #{tpu_custom_call.1} parent=1 // pred_check_branch
      %54 = sbr.rel (0) target = $region33
    $region32: #{tpu_custom_call.1} parent=1 // pred_region
      _
    $region33: #{tpu_custom_call.1} parent=1 // pred_fallthru
      _
    // Predicated region
    $region34: #{tpu_custom_call.1} parent=1 // pred_check
      _
    $region35: #{tpu_custom_call.1} parent=1 // pred_check_branch
      %56 = sbr.rel (0) target = $region37
    $region36: #{tpu_custom_call.1} parent=1 // pred_region
      _
    $region37: #{tpu_custom_call.1} parent=1 // pred_fallthru
      _
    // Predicated region
    $region38: #{tpu_custom_call.1} parent=1 // pred_check
      _
    $region39: #{tpu_custom_call.1} parent=1 // pred_check_branch
      %58 = sbr.rel (0) target = $region41
    $region40: #{tpu_custom_call.1} parent=1 // pred_region
      %60 = dma.done [#allocation3], 512
    $region41: #{tpu_custom_call.1} parent=1 // pred_fallthru
      _
    // Predicated region
    $region42: #{tpu_custom_call.1} parent=1 // pred_check
      _
    $region43: #{tpu_custom_call.1} parent=1 // pred_check_branch
      %62 = sbr.rel (0) target = $region45
    $region44: #{tpu_custom_call.1} parent=1 // pred_region
      %64 = dma.done [#allocation6], 2048
    $region45: #{tpu_custom_call.1} parent=1 // pred_fallthru
      _
    %v65 = vld [vmem:[%s0] sm:$0xff]
    %v66 = vld [vmem:[#allocation2] sm:$0xff]
    %v67 = vld [vmem:[#allocation2 + $0x8] sm:$0xff]
    %v68 = vld [vmem:[#allocation2 + $0x10] sm:$0xff]
    %v69 = vld [vmem:[#allocation2 + $0x18] sm:$0xff]
    %v70 = vld [vmem:[%s2] sm:$0x1]
    %v72 = vperm.slane %v70, 0
    %vm74 = vcmask 261120
    %v76 = vsel %vm74, %v65, 0
    %78 = vmatpush.msra.mxu0 0.0
    %79 = vmatpush.msra.mxu0 0.0
    %80 = vmatpush.msra.mxu0 0.0
    %81 = vmatpush.msra.mxu0 0.0
    %82 = vmatpush.msra.mxu0 0.0
    %83 = vmatpush.msra.mxu0 0.0
    %84 = vmatpush.msra.mxu0 0.0
    %85 = vmatpush.msra.mxu0 0.0
    %86 = vmatpush.msra.mxu0 0.0
    %87 = vmatpush.msra.mxu0 0.0
    %88 = vmatpush.msra.mxu0 0.0
    %89 = vmatpush.msra.mxu0 0.0
    %90 = vmatpush.msra.mxu0 %v69
    %91 = vmatpush.msra.mxu0 %v68
    %92 = vmatpush.msra.mxu0 %v67
    %93 = vmatpush.msra.mxu0 %v66
    %94 = vmatmul.f32.gmra.mxu0 %v76
    %v95 = vpop.f32.mrf.mxu0
    %v96 = vadd.f32 %v72, %v95
    %97 = vdwg.mxu0
    %v98 = vmul.f32 %v96, 0.5
    %v99 = vmul.f32 %v96, 0.70710677
    %v100 = vmul.f32 %v99, %v99
    %v101 = vmin.f32 16.0, %v100
    %v102 = vmul.f32 %v101, 2.1237322e-06
    %v103 = vadd.f32 %v102, 0.00028619796
    %v104 = vmul.f32 %v101, %v103
    %v105 = vadd.f32 %v104, 0.0036580483
    %v106 = vmul.f32 %v101, %v105
    %v107 = vadd.f32 %v106, 0.05243302
    %v108 = vmul.f32 %v101, %v107
    %v109 = vadd.f32 %v108, 0.18741608
    %v110 = vmul.f32 %v101, %v109
    %v111 = vadd.f32 %v110, 1.1283791
    %v112 = vmul.f32 %v99, %v111
    %v113 = vmul.f32 %v101, 3.8918573e-05
    %v114 = vadd.f32 %v113, 0.001143296
    %v115 = vmul.f32 %v101, %v114
    %v116 = vadd.f32 %v115, 0.014752088
    %v117 = vmul.f32 %v101, %v116
    %v118 = vadd.f32 %v117, 0.112945676
    %v119 = vmul.f32 %v101, %v118
    %v120 = vadd.f32 %v119, 0.4994258
    %v121 = vmul.f32 %v101, %v120
    %v122 = vadd.f32 %v121, 1.0
    %v123 = vrcp.pop %v122
    %v124 = vmul.f32 %v122, %v123
    %v125 = vsub.f32 1.0, %v124
    %v126 = vmul.f32 %v123, %v125
    %v127 = vadd.f32 %v123, %v126
    %vm128 = vweird.f32 %v122
    %vm129 = vweird.f32 %v123
    %vm130 = vmor %vm128, %vm129
    %v131 = vsel %vm130, %v123, %v127
    %v132 = vand.u32 2147483647, %v122
    %vm133 = vcmp.eq.f32.partialorder %v132, 8.507059e+37
    %v134 = vand.u32 %v122, 2147483648
    %v135 = vor.u32 1.1754944e-38, %v134
    %v136 = vsel %vm133, %v135, %v131
    %v137 = vmul.f32 %v112, %v136
    %v138 = vmin.f32 %v137, 1.0
    %v139 = vmax.f32 %v138, -1.0
    %v140 = vadd.f32 %v139, 1.0
    %v141 = vmul.f32 %v98, %v140
    %v142 = vld [vmem:[%s3] sm:$0xff]
    %v143 = vld [vmem:[%s3 + $0x8] sm:$0xff]
    %v144 = vld [vmem:[%s3 + $0x10] sm:$0xff]
    %v145 = vld [vmem:[%s3 + $0x18] sm:$0xff]
    %v146 = vld [vmem:[%s3 + $0x20] sm:$0xff]
    %v147 = vld [vmem:[%s3 + $0x28] sm:$0xff]
    %v148 = vld [vmem:[%s3 + $0x30] sm:$0xff]
    %v149 = vld [vmem:[%s3 + $0x38] sm:$0xff]
    %v150 = vld [vmem:[%s3 + $0x40] sm:$0xff]
    %v151 = vld [vmem:[%s3 + $0x48] sm:$0xff]
    %v152 = vld [vmem:[%s3 + $0x50] sm:$0xff]
    %v153 = vld [vmem:[%s3 + $0x58] sm:$0xff]
    %v154 = vld [vmem:[%s3 + $0x60] sm:$0xff]
    %v155 = vld [vmem:[%s3 + $0x68] sm:$0xff]
    %v156 = vld [vmem:[%s3 + $0x70] sm:$0xff]
    %v157 = vld [vmem:[%s3 + $0x78] sm:$0xff]
    %v158 = vld [vmem:[%s4] sm:$0x1]
    %v160 = vperm.slane %v158, 0
    %162 = vmatpush.msra.mxu0 %v157
    %163 = vmatpush.msra.mxu0 %v156
    %164 = vmatpush.msra.mxu0 %v155
    %165 = vmatpush.msra.mxu0 %v154
    %166 = vmatpush.msra.mxu0 %v153
    %167 = vmatpush.msra.mxu0 %v152
    %168 = vmatpush.msra.mxu0 %v151
    %169 = vmatpush.msra.mxu0 %v150
    %170 = vmatpush.msra.mxu0 %v149
    %171 = vmatpush.msra.mxu0 %v148
    %172 = vmatpush.msra.mxu0 %v147
    %173 = vmatpush.msra.mxu0 %v146
    %174 = vmatpush.msra.mxu0 %v145
    %175 = vmatpush.msra.mxu0 %v144
    %176 = vmatpush.msra.mxu0 %v143
    %177 = vmatpush.msra.mxu0 %v142
    %178 = vmatmul.f32.gmra.mxu0 %v141
    %v179 = vpop.f32.mrf.mxu0
    %v180 = vadd.f32 %v160, %v179
    %181 = vdwg.mxu0
    %v182 = vmul.f32 %v180, 0.5
    %v183 = vmul.f32 %v180, 0.70710677
    %v184 = vmul.f32 %v183, %v183
    %v185 = vmin.f32 16.0, %v184
    %v186 = vmul.f32 %v185, 2.1237322e-06
    %v187 = vadd.f32 %v186, 0.00028619796
    %v188 = vmul.f32 %v185, %v187
    %v189 = vadd.f32 %v188, 0.0036580483
    %v190 = vmul.f32 %v185, %v189
    %v191 = vadd.f32 %v190, 0.05243302
    %v192 = vmul.f32 %v185, %v191
    %v193 = vadd.f32 %v192, 0.18741608
    %v194 = vmul.f32 %v185, %v193
    %v195 = vadd.f32 %v194, 1.1283791
    %v196 = vmul.f32 %v183, %v195
    %v197 = vmul.f32 %v185, 3.8918573e-05
    %v198 = vadd.f32 %v197, 0.001143296
    %v199 = vmul.f32 %v185, %v198
    %v200 = vadd.f32 %v199, 0.014752088
    %v201 = vmul.f32 %v185, %v200
    %v202 = vadd.f32 %v201, 0.112945676
    %v203 = vmul.f32 %v185, %v202
    %v204 = vadd.f32 %v203, 0.4994258
    %v205 = vmul.f32 %v185, %v204
    %v206 = vadd.f32 %v205, 1.0
    %v207 = vrcp.pop %v206
    %v208 = vmul.f32 %v206, %v207
    %v209 = vsub.f32 1.0, %v208
    %v210 = vmul.f32 %v207, %v209
    %v211 = vadd.f32 %v207, %v210
    %vm212 = vweird.f32 %v206
    %vm213 = vweird.f32 %v207
    %vm214 = vmor %vm212, %vm213
    %v215 = vsel %vm214, %v207, %v211
    %v216 = vand.u32 2147483647, %v206
    %vm217 = vcmp.eq.f32.partialorder %v216, 8.507059e+37
    %v218 = vand.u32 %v206, 2147483648
    %v219 = vor.u32 1.1754944e-38, %v218
    %v220 = vsel %vm217, %v219, %v215
    %v221 = vmul.f32 %v196, %v220
    %v222 = vmin.f32 %v221, 1.0
    %v223 = vmax.f32 %v222, -1.0
    %v224 = vadd.f32 %v223, 1.0
    %v225 = vmul.f32 %v182, %v224
    %v226 = vld [vmem:[#allocation5] sm:$0xff]
    %v227 = vld [vmem:[#allocation5 + $0x8] sm:$0xff]
    %v228 = vld [vmem:[#allocation5 + $0x10] sm:$0xff]
    %v229 = vld [vmem:[#allocation5 + $0x18] sm:$0xff]
    %v230 = vld [vmem:[#allocation5 + $0x20] sm:$0xff]
    %v231 = vld [vmem:[#allocation5 + $0x28] sm:$0xff]
    %v232 = vld [vmem:[#allocation5 + $0x30] sm:$0xff]
    %v233 = vld [vmem:[#allocation5 + $0x38] sm:$0xff]
    %v234 = vld [vmem:[#allocation5 + $0x40] sm:$0xff]
    %v235 = vld [vmem:[#allocation5 + $0x48] sm:$0xff]
    %v236 = vld [vmem:[#allocation5 + $0x50] sm:$0xff]
    %v237 = vld [vmem:[#allocation5 + $0x58] sm:$0xff]
    %v238 = vld [vmem:[#allocation5 + $0x60] sm:$0xff]
    %v239 = vld [vmem:[#allocation5 + $0x68] sm:$0xff]
    %v240 = vld [vmem:[#allocation5 + $0x70] sm:$0xff]
    %v241 = vld [vmem:[#allocation5 + $0x78] sm:$0xff]
    %v242 = vld [vmem:[%s6] sm:$0x1]
    %v244 = vperm.slane %v242, 0
    %246 = vmatpush.msra.mxu0 %v241
    %247 = vmatpush.msra.mxu0 %v240
    %248 = vmatpush.msra.mxu0 %v239
    %249 = vmatpush.msra.mxu0 %v238
    %250 = vmatpush.msra.mxu0 %v237
    %251 = vmatpush.msra.mxu0 %v236
    %252 = vmatpush.msra.mxu0 %v235
    %253 = vmatpush.msra.mxu0 %v234
    %254 = vmatpush.msra.mxu0 %v233
    %255 = vmatpush.msra.mxu0 %v232
    %256 = vmatpush.msra.mxu0 %v231
    %257 = vmatpush.msra.mxu0 %v230
    %258 = vmatpush.msra.mxu0 %v229
    %259 = vmatpush.msra.mxu0 %v228
    %260 = vmatpush.msra.mxu0 %v227
    %261 = vmatpush.msra.mxu0 %v226
    %262 = vmatmul.f32.gmra.mxu0 %v225
    %v263 = vpop.f32.mrf.mxu0
    %v264 = vadd.f32 %v244, %v263
    %265 = vdwg.mxu0
    %v266 = vmul.f32 %v264, 0.5
    %v267 = vmul.f32 %v264, 0.70710677
    %v268 = vmul.f32 %v267, %v267
    %v269 = vmin.f32 16.0, %v268
    %v270 = vmul.f32 %v269, 2.1237322e-06
    %v271 = vadd.f32 %v270, 0.00028619796
    %v272 = vmul.f32 %v269, %v271
    %v273 = vadd.f32 %v272, 0.0036580483
    %v274 = vmul.f32 %v269, %v273
    %v275 = vadd.f32 %v274, 0.05243302
    %v276 = vmul.f32 %v269, %v275
    %v277 = vadd.f32 %v276, 0.18741608
    %v278 = vmul.f32 %v269, %v277
    %v279 = vadd.f32 %v278, 1.1283791
    %v280 = vmul.f32 %v267, %v279
    %v281 = vmul.f32 %v269, 3.8918573e-05
    %v282 = vadd.f32 %v281, 0.001143296
    %v283 = vmul.f32 %v269, %v282
    %v284 = vadd.f32 %v283, 0.014752088
    %v285 = vmul.f32 %v269, %v284
    %v286 = vadd.f32 %v285, 0.112945676
    %v287 = vmul.f32 %v269, %v286
    %v288 = vadd.f32 %v287, 0.4994258
    %v289 = vmul.f32 %v269, %v288
    %v290 = vadd.f32 %v289, 1.0
    %v291 = vrcp.pop %v290
    %v292 = vmul.f32 %v290, %v291
    %v293 = vsub.f32 1.0, %v292
    %v294 = vmul.f32 %v291, %v293
    %v295 = vadd.f32 %v291, %v294
    %vm296 = vweird.f32 %v290
    %vm297 = vweird.f32 %v291
    %vm298 = vmor %vm296, %vm297
    %v299 = vsel %vm298, %v291, %v295
    %v300 = vand.u32 2147483647, %v290
    %vm301 = vcmp.eq.f32.partialorder %v300, 8.507059e+37
    %v302 = vand.u32 %v290, 2147483648
    %v303 = vor.u32 1.1754944e-38, %v302
    %v304 = vsel %vm301, %v303, %v299
    %v305 = vmul.f32 %v280, %v304
    %v306 = vmin.f32 %v305, 1.0
    %v307 = vmax.f32 %v306, -1.0
    %v308 = vadd.f32 %v307, 1.0
    %v309 = vmul.f32 %v266, %v308
    %v310 = vld [vmem:[%s7] sm:$0xff]
    %v311 = vld [vmem:[%s7 + $0x8] sm:$0xff]
    %v312 = vld [vmem:[%s7 + $0x10] sm:$0xff]
    %v313 = vld [vmem:[%s7 + $0x18] sm:$0xff]
    %v314 = vld [vmem:[%s7 + $0x20] sm:$0xff]
    %v315 = vld [vmem:[%s7 + $0x28] sm:$0xff]
    %v316 = vld [vmem:[%s7 + $0x30] sm:$0xff]
    %v317 = vld [vmem:[%s7 + $0x38] sm:$0xff]
    %v318 = vld [vmem:[%s7 + $0x40] sm:$0xff]
    %v319 = vld [vmem:[%s7 + $0x48] sm:$0xff]
    %v320 = vld [vmem:[%s7 + $0x50] sm:$0xff]
    %v321 = vld [vmem:[%s7 + $0x58] sm:$0xff]
    %v322 = vld [vmem:[%s7 + $0x60] sm:$0xff]
    %v323 = vld [vmem:[%s7 + $0x68] sm:$0xff]
    %v324 = vld [vmem:[%s7 + $0x70] sm:$0xff]
    %v325 = vld [vmem:[%s7 + $0x78] sm:$0xff]
    %v326 = vld [vmem:[%s8] sm:$0x1]
    %v328 = vperm.slane %v326, 0
    %330 = vmatpush.msra.mxu0 %v325
    %331 = vmatpush.msra.mxu0 %v324
    %332 = vmatpush.msra.mxu0 %v323
    %333 = vmatpush.msra.mxu0 %v322
    %334 = vmatpush.msra.mxu0 %v321
    %335 = vmatpush.msra.mxu0 %v320
    %336 = vmatpush.msra.mxu0 %v319
    %337 = vmatpush.msra.mxu0 %v318
    %338 = vmatpush.msra.mxu0 %v317
    %339 = vmatpush.msra.mxu0 %v316
    %340 = vmatpush.msra.mxu0 %v315
    %341 = vmatpush.msra.mxu0 %v314
    %342 = vmatpush.msra.mxu0 %v313
    %343 = vmatpush.msra.mxu0 %v312
    %344 = vmatpush.msra.mxu0 %v311
    %345 = vmatpush.msra.mxu0 %v310
    %346 = vmatmul.f32.gmra.mxu0 %v309
    %v347 = vpop.f32.mrf.mxu0
    %v348 = vadd.f32 %v328, %v347
    %349 = vdwg.mxu0
    %vm350 = vcmask 130048
    %351 = vst.msk [vmem:[#allocation7] sm:$0xff] %vm350, %v348
    // Predicated region
    $region46: #{tpu_custom_call.1} parent=1 // pred_check
      _
    $region47: #{tpu_custom_call.1} parent=1 // pred_check_branch
      %353 = sbr.rel (0) target = $region49
    $region48: #{tpu_custom_call.1} parent=1 // pred_region
      %355 = vsyncadd [#allocation4], 0
      %s357 = sshll.u32 [#allocation7], 4
      %s358 = int_to_ptr.vmem [resolvable:$true] %s357
      %s359 = sshll.u32 %s9, 4
      %s360 = int_to_ptr.hbm [resolvable:$true] %s359
      %362 = dma.vmem_to_hbm [thread:$0]  %s358, 128, %s360, [#allocation4]
    $region49: #{tpu_custom_call.1} parent=1 // pred_fallthru
      _
    // Predicated region
    $region50: #{tpu_custom_call.1} parent=1 // pred_check
      _
    $region51: #{tpu_custom_call.1} parent=1 // pred_check_branch
      %364 = sbr.rel (0) target = $region53
    $region52: #{tpu_custom_call.1} parent=1 // pred_region
      %366 = dma.done [#allocation4], 128
    $region53: #{tpu_custom_call.1} parent=1 // pred_fallthru
      _
    %367 = vsyncpa [#allocation3], 1
    %368 = vsyncpa [#allocation6], 1
    %369 = vsyncpa [#allocation4], 1

</llo_original>
